<compile_context>
chip_gen: v7x
topology: tpu7x:2x2x1
jax: 0.10.0
libtpu: 0.0.40
codegen_flags: <defaults>
</compile_context>

<pallas_src>
import functools

import jax
import jax.numpy as jnp
from jax import lax
from jax.experimental import pallas as pl
from jax.experimental.pallas import tpu as pltpu


def _conv3x3_vpu_kernel(x_ref, w_ref, b_ref, o_ref, *, H, W, C_in, C_out):
    """3x3 'same' conv on a lane-dense channel-planar layout.

    x_ref: (C_in, Nb, H*W)        VMEM, this step's slice of batch*coil, H*W on lanes
    w_ref: (3*3*C_in*C_out,)      SMEM, flat conv weights (HWIO order)
    b_ref: (C_out,)               SMEM, bias
    o_ref: (C_out, Nb, H*W)       VMEM, all output channels for this step's N-slice
    """
    Nb = x_ref.shape[1]
    HW = H * W

    # --- Hoisted border masks (zero padding), built once per step ------------------
    pos = lax.broadcasted_iota(jnp.int32, (Nb, HW), 1)
    if (W & (W - 1)) == 0:
        col = pos & (W - 1)            # cheap bitwise AND for power-of-two W
    else:
        col = pos % W                  # correct (but VPU divide) for general W
    row_ge_1 = pos >= W                # row >= 1   (no divide needed)
    row_le_h2 = pos < (H - 1) * W      # row <= H-2
    col_ge_1 = col >= 1                # col >= 1
    col_le_w2 = col <= W - 2           # col <= W-2

    # --- Hoist all scalar weights out of the FMA stream (static SMEM indices) ------
    wvals = [w_ref[i] for i in range(9 * C_in * C_out)]

    # Load the channel planes once; everything below is register/VPU/XLU work.
    planes = [x_ref[ci].astype(jnp.float32) for ci in range(C_in)]

    # Accumulators start at the bias (saves the epilogue adds).
    acc = [jnp.full((Nb, HW), b_ref[co], jnp.float32) for co in range(C_out)]

    for kh in range(3):
        for kw in range(3):
            dh, dw = kh - 1, kw - 1
            s = dh * W + dw                 # flat source offset of this tap
            shift = (-s) % HW               # rolled[p] == plane[p + s] (mod HW)

            # AND together the (at most 2) border masks this tap needs.
            mask = None
            if dh < 0:
                mask = row_ge_1
            elif dh > 0:
                mask = row_le_h2
            if dw < 0:
                mask = col_ge_1 if mask is None else (mask & col_ge_1)
            elif dw > 0:
                mask = col_le_w2 if mask is None else (mask & col_le_w2)

            for ci in range(C_in):
                tap = planes[ci]
                if shift:
                    tap = pltpu.roll(tap, shift, axis=1)   # XLU rotation, no relayout
                if mask is not None:
                    tap = jnp.where(mask, tap, 0.0)        # zero-padding via select
                wbase = ((kh * 3 + kw) * C_in + ci) * C_out
                for co in range(C_out):
                    # scalar weight broadcast-multiplied on the VPU (f32 accumulate)
                    acc[co] = acc[co] + wvals[wbase + co] * tap

    for co in range(C_out):
        o_ref[co] = acc[co].astype(o_ref.dtype)            # dense 256-lane stores


def conv3x3_pallas(x_nhwc, weight, bias, *, n_steps=None):
    """x_nhwc: (N, H, W, C_in); weight: (3,3,C_in,C_out) (HWIO); bias: (C_out,)."""
    N, H, W, C_in = x_nhwc.shape
    C_out = weight.shape[-1]
    HW = H * W

    # Lane-dense channel-planar presentation.  Wrapper-side layout plumbing only; at
    # realistic sizes hoist this into the surrounding model (see TODO at top of file).
    x_planar = jnp.transpose(x_nhwc.reshape(N, HW, C_in), (2, 0, 1))   # (C_in, N, HW)
    w_flat = weight.reshape(-1)                                         # (9*C_in*C_out,)

    if n_steps is None:
        # Single step by default: v5e/v6e are single-TC, and at small sizes even a
        # v7x 2-core split cannot amortize the ~0.35us per-step cost.  When splitting,
        # split the batch*coil (N) axis -- never C_out -- so each step does half of
        # the roll/mask/load work; keep the sublane dim (N//2) a multiple of 8.
        n_steps = 2 if (N % 2 == 0 and (N // 2) % 8 == 0
                        and HW % 128 == 0 and N * HW >= (1 << 17)) else 1
    n_blk = N // n_steps

    kernel = functools.partial(_conv3x3_vpu_kernel, H=H, W=W, C_in=C_in, C_out=C_out)

    y_planar = pl.pallas_call(
        kernel,
        out_shape=jax.ShapeDtypeStruct((C_out, N, HW), x_nhwc.dtype),
        grid_spec=pltpu.PrefetchScalarGridSpec(
            num_scalar_prefetch=0,
            grid=(n_steps,),
            in_specs=[
                # Last two block dims either equal the full array dims (n_steps=1) or
                # are (8,128)-aligned (N-split) -> clean tiling, unmasked loads.
                pl.BlockSpec((C_in, n_blk, HW), lambda i: (0, i, 0)),
                pl.BlockSpec(memory_space=pltpu.MemorySpace.SMEM),   # conv weights
                pl.BlockSpec(memory_space=pltpu.MemorySpace.SMEM),   # bias
            ],
            out_specs=pl.BlockSpec((C_out, n_blk, HW), lambda i: (0, i, 0)),
        ),
        compiler_params=pltpu.CompilerParams(
            dimension_semantics=("parallel",)),
    )(x_planar, w_flat, bias)

    # Back to NHWC; the final reshape to (batch, coil, H, W, C_out) is free metadata.
    return jnp.transpose(y_planar, (1, 2, 0)).reshape(N, H, W, C_out)


@jax.jit
def multi_coil_forward(x, weight, bias):
    """MultiCoil.forward with coil_dim=1.

    x: (batch, coil, H, W, C_in)  ->  (batch, coil, H, W, C_out)
    """
    batch, coil, H, W, C_in = x.shape
    x_flat = x.reshape(batch * coil, H, W, C_in)      # fold batch*coil
    y_flat = conv3x3_pallas(x_flat, weight, bias)     # "kspace_model" applied per coil
    C_out = y_flat.shape[-1]
    return y_flat.reshape(batch, coil, H, W, C_out)


def _reference_forward(x, weight, bias):
    """Pure-JAX reference (mirrors the PyTorch NCHW conv path exactly)."""
    batch, coil, H, W, C_in = x.shape
    xf = x.reshape(batch * coil, H, W, C_in)
    xf = jnp.transpose(xf, (0, 3, 1, 2))                       # NCHW (as torch)
    w_oihw = jnp.transpose(weight, (3, 2, 0, 1))               # (Cout, Cin, 3, 3)
    y = lax.conv_general_dilated(
        xf, w_oihw, window_strides=(1, 1), padding=((1, 1), (1, 1)),
        dimension_numbers=("NCHW", "OIHW", "NCHW"))
    y = y + bias.reshape(1, -1, 1, 1)
    y = jnp.transpose(y, (0, 2, 3, 1))                         # back to NHWC
    return y.reshape(batch, coil, H, W, -1)


if __name__ == "__main__":
    # Small shapes: batch=2, coil=4, H=W=16, C_in=2 (real/imag k-space), C_out=4.
    batch, coil, H, W, C_in, C_out = 2, 4, 16, 16, 2, 4

    key = jax.random.PRNGKey(0)
    kx, kw, kb = jax.random.split(key, 3)
    x = jax.random.normal(kx, (batch, coil, H, W, C_in), dtype=jnp.float32)
    # Deterministic synthetic "kspace_model" parameters: Conv2d(C_in, C_out, 3, padding=1).
    weight = (jax.random.normal(kw, (3, 3, C_in, C_out), dtype=jnp.float32)
              * (1.0 / jnp.sqrt(9.0 * C_in)))
    bias = jax.random.normal(kb, (C_out,), dtype=jnp.float32) * 0.01

    out = jax.block_until_ready(multi_coil_forward(x, weight, bias))
    ref = jax.block_until_ready(_reference_forward(x, weight, bias))

    assert out.shape == (batch, coil, H, W, C_out), out.shape
    assert jnp.allclose(out, ref, atol=1e-4, rtol=1e-4), float(
        jnp.max(jnp.abs(out - ref)))

    print("KERNEL_OK")
</pallas_src>

<mosaic_0001>
module attributes {stable_mosaic.version = 11 : i64} {
  func.func @_conv3x3_vpu_kernel(%arg0: i32, %arg1: memref<2x8x256xf32, #tpu.memory_space<vmem>>, %arg2: memref<72xf32, #tpu.memory_space<smem>>, %arg3: memref<4xf32, #tpu.memory_space<smem>>, %arg4: memref<4x8x256xf32, #tpu.memory_space<vmem>>) attributes {dimension_semantics = [#tpu.dimension_semantics<parallel>], iteration_bounds = array<i64: 1>, scalar_prefetch = 0 : i64, scratch_operands = 0 : i64, tpu.core_type = #tpu.core_type<tc>, window_params = [{transform_indices = @transform_0, window_bounds = array<i64: 2, 8, 256>}, {transform_indices = @transform_1, window_bounds = array<i64: 72>}, {transform_indices = @transform_2, window_bounds = array<i64: 4>}, {transform_indices = @transform_3, window_bounds = array<i64: 4, 8, 256>}]} {
    %0 = tpu.iota {dimensions = array<i32: 1>} : vector<8x256xi32>
    %c15_i32 = arith.constant 15 : i32
    %1 = vector.broadcast %c15_i32 : i32 to vector<8x256xi32>
    %2 = arith.andi %0, %1 : vector<8x256xi32>
    %c16_i32 = arith.constant 16 : i32
    %3 = vector.broadcast %c16_i32 : i32 to vector<8x256xi32>
    %4 = arith.cmpi sge, %0, %3 : vector<8x256xi32>
    %c240_i32 = arith.constant 240 : i32
    %5 = vector.broadcast %c240_i32 : i32 to vector<8x256xi32>
    %6 = arith.cmpi slt, %0, %5 : vector<8x256xi32>
    %c1_i32 = arith.constant 1 : i32
    %7 = vector.broadcast %c1_i32 : i32 to vector<8x256xi32>
    %8 = arith.cmpi sge, %2, %7 : vector<8x256xi32>
    %c14_i32 = arith.constant 14 : i32
    %9 = vector.broadcast %c14_i32 : i32 to vector<8x256xi32>
    %10 = arith.cmpi sle, %2, %9 : vector<8x256xi32>
    %c0 = arith.constant 0 : index
    %11 = memref.load %arg2[%c0] : memref<72xf32, #tpu.memory_space<smem>>
    %c1 = arith.constant 1 : index
    %12 = memref.load %arg2[%c1] : memref<72xf32, #tpu.memory_space<smem>>
    %c2 = arith.constant 2 : index
    %13 = memref.load %arg2[%c2] : memref<72xf32, #tpu.memory_space<smem>>
    %c3 = arith.constant 3 : index
    %14 = memref.load %arg2[%c3] : memref<72xf32, #tpu.memory_space<smem>>
    %c4 = arith.constant 4 : index
    %15 = memref.load %arg2[%c4] : memref<72xf32, #tpu.memory_space<smem>>
    %c5 = arith.constant 5 : index
    %16 = memref.load %arg2[%c5] : memref<72xf32, #tpu.memory_space<smem>>
    %c6 = arith.constant 6 : index
    %17 = memref.load %arg2[%c6] : memref<72xf32, #tpu.memory_space<smem>>
    %c7 = arith.constant 7 : index
    %18 = memref.load %arg2[%c7] : memref<72xf32, #tpu.memory_space<smem>>
    %c8 = arith.constant 8 : index
    %19 = memref.load %arg2[%c8] : memref<72xf32, #tpu.memory_space<smem>>
    %c9 = arith.constant 9 : index
    %20 = memref.load %arg2[%c9] : memref<72xf32, #tpu.memory_space<smem>>
    %c10 = arith.constant 10 : index
    %21 = memref.load %arg2[%c10] : memref<72xf32, #tpu.memory_space<smem>>
    %c11 = arith.constant 11 : index
    %22 = memref.load %arg2[%c11] : memref<72xf32, #tpu.memory_space<smem>>
    %c12 = arith.constant 12 : index
    %23 = memref.load %arg2[%c12] : memref<72xf32, #tpu.memory_space<smem>>
    %c13 = arith.constant 13 : index
    %24 = memref.load %arg2[%c13] : memref<72xf32, #tpu.memory_space<smem>>
    %c14 = arith.constant 14 : index
    %25 = memref.load %arg2[%c14] : memref<72xf32, #tpu.memory_space<smem>>
    %c15 = arith.constant 15 : index
    %26 = memref.load %arg2[%c15] : memref<72xf32, #tpu.memory_space<smem>>
    %c16 = arith.constant 16 : index
    %27 = memref.load %arg2[%c16] : memref<72xf32, #tpu.memory_space<smem>>
    %c17 = arith.constant 17 : index
    %28 = memref.load %arg2[%c17] : memref<72xf32, #tpu.memory_space<smem>>
    %c18 = arith.constant 18 : index
    %29 = memref.load %arg2[%c18] : memref<72xf32, #tpu.memory_space<smem>>
    %c19 = arith.constant 19 : index
    %30 = memref.load %arg2[%c19] : memref<72xf32, #tpu.memory_space<smem>>
    %c20 = arith.constant 20 : index
    %31 = memref.load %arg2[%c20] : memref<72xf32, #tpu.memory_space<smem>>
    %c21 = arith.constant 21 : index
    %32 = memref.load %arg2[%c21] : memref<72xf32, #tpu.memory_space<smem>>
    %c22 = arith.constant 22 : index
    %33 = memref.load %arg2[%c22] : memref<72xf32, #tpu.memory_space<smem>>
    %c23 = arith.constant 23 : index
    %34 = memref.load %arg2[%c23] : memref<72xf32, #tpu.memory_space<smem>>
    %c24 = arith.constant 24 : index
    %35 = memref.load %arg2[%c24] : memref<72xf32, #tpu.memory_space<smem>>
    %c25 = arith.constant 25 : index
    %36 = memref.load %arg2[%c25] : memref<72xf32, #tpu.memory_space<smem>>
    %c26 = arith.constant 26 : index
    %37 = memref.load %arg2[%c26] : memref<72xf32, #tpu.memory_space<smem>>
    %c27 = arith.constant 27 : index
    %38 = memref.load %arg2[%c27] : memref<72xf32, #tpu.memory_space<smem>>
    %c28 = arith.constant 28 : index
    %39 = memref.load %arg2[%c28] : memref<72xf32, #tpu.memory_space<smem>>
    %c29 = arith.constant 29 : index
    %40 = memref.load %arg2[%c29] : memref<72xf32, #tpu.memory_space<smem>>
    %c30 = arith.constant 30 : index
    %41 = memref.load %arg2[%c30] : memref<72xf32, #tpu.memory_space<smem>>
    %c31 = arith.constant 31 : index
    %42 = memref.load %arg2[%c31] : memref<72xf32, #tpu.memory_space<smem>>
    %c32 = arith.constant 32 : index
    %43 = memref.load %arg2[%c32] : memref<72xf32, #tpu.memory_space<smem>>
    %c33 = arith.constant 33 : index
    %44 = memref.load %arg2[%c33] : memref<72xf32, #tpu.memory_space<smem>>
    %c34 = arith.constant 34 : index
    %45 = memref.load %arg2[%c34] : memref<72xf32, #tpu.memory_space<smem>>
    %c35 = arith.constant 35 : index
    %46 = memref.load %arg2[%c35] : memref<72xf32, #tpu.memory_space<smem>>
    %c36 = arith.constant 36 : index
    %47 = memref.load %arg2[%c36] : memref<72xf32, #tpu.memory_space<smem>>
    %c37 = arith.constant 37 : index
    %48 = memref.load %arg2[%c37] : memref<72xf32, #tpu.memory_space<smem>>
    %c38 = arith.constant 38 : index
    %49 = memref.load %arg2[%c38] : memref<72xf32, #tpu.memory_space<smem>>
    %c39 = arith.constant 39 : index
    %50 = memref.load %arg2[%c39] : memref<72xf32, #tpu.memory_space<smem>>
    %c40 = arith.constant 40 : index
    %51 = memref.load %arg2[%c40] : memref<72xf32, #tpu.memory_space<smem>>
    %c41 = arith.constant 41 : index
    %52 = memref.load %arg2[%c41] : memref<72xf32, #tpu.memory_space<smem>>
    %c42 = arith.constant 42 : index
    %53 = memref.load %arg2[%c42] : memref<72xf32, #tpu.memory_space<smem>>
    %c43 = arith.constant 43 : index
    %54 = memref.load %arg2[%c43] : memref<72xf32, #tpu.memory_space<smem>>
    %c44 = arith.constant 44 : index
    %55 = memref.load %arg2[%c44] : memref<72xf32, #tpu.memory_space<smem>>
    %c45 = arith.constant 45 : index
    %56 = memref.load %arg2[%c45] : memref<72xf32, #tpu.memory_space<smem>>
    %c46 = arith.constant 46 : index
    %57 = memref.load %arg2[%c46] : memref<72xf32, #tpu.memory_space<smem>>
    %c47 = arith.constant 47 : index
    %58 = memref.load %arg2[%c47] : memref<72xf32, #tpu.memory_space<smem>>
    %c48 = arith.constant 48 : index
    %59 = memref.load %arg2[%c48] : memref<72xf32, #tpu.memory_space<smem>>
    %c49 = arith.constant 49 : index
    %60 = memref.load %arg2[%c49] : memref<72xf32, #tpu.memory_space<smem>>
    %c50 = arith.constant 50 : index
    %61 = memref.load %arg2[%c50] : memref<72xf32, #tpu.memory_space<smem>>
    %c51 = arith.constant 51 : index
    %62 = memref.load %arg2[%c51] : memref<72xf32, #tpu.memory_space<smem>>
    %c52 = arith.constant 52 : index
    %63 = memref.load %arg2[%c52] : memref<72xf32, #tpu.memory_space<smem>>
    %c53 = arith.constant 53 : index
    %64 = memref.load %arg2[%c53] : memref<72xf32, #tpu.memory_space<smem>>
    %c54 = arith.constant 54 : index
    %65 = memref.load %arg2[%c54] : memref<72xf32, #tpu.memory_space<smem>>
    %c55 = arith.constant 55 : index
    %66 = memref.load %arg2[%c55] : memref<72xf32, #tpu.memory_space<smem>>
    %c56 = arith.constant 56 : index
    %67 = memref.load %arg2[%c56] : memref<72xf32, #tpu.memory_space<smem>>
    %c57 = arith.constant 57 : index
    %68 = memref.load %arg2[%c57] : memref<72xf32, #tpu.memory_space<smem>>
    %c58 = arith.constant 58 : index
    %69 = memref.load %arg2[%c58] : memref<72xf32, #tpu.memory_space<smem>>
    %c59 = arith.constant 59 : index
    %70 = memref.load %arg2[%c59] : memref<72xf32, #tpu.memory_space<smem>>
    %c60 = arith.constant 60 : index
    %71 = memref.load %arg2[%c60] : memref<72xf32, #tpu.memory_space<smem>>
    %c61 = arith.constant 61 : index
    %72 = memref.load %arg2[%c61] : memref<72xf32, #tpu.memory_space<smem>>
    %c62 = arith.constant 62 : index
    %73 = memref.load %arg2[%c62] : memref<72xf32, #tpu.memory_space<smem>>
    %c63 = arith.constant 63 : index
    %74 = memref.load %arg2[%c63] : memref<72xf32, #tpu.memory_space<smem>>
    %c64 = arith.constant 64 : index
    %75 = memref.load %arg2[%c64] : memref<72xf32, #tpu.memory_space<smem>>
    %c65 = arith.constant 65 : index
    %76 = memref.load %arg2[%c65] : memref<72xf32, #tpu.memory_space<smem>>
    %c66 = arith.constant 66 : index
    %77 = memref.load %arg2[%c66] : memref<72xf32, #tpu.memory_space<smem>>
    %c67 = arith.constant 67 : index
    %78 = memref.load %arg2[%c67] : memref<72xf32, #tpu.memory_space<smem>>
    %c68 = arith.constant 68 : index
    %79 = memref.load %arg2[%c68] : memref<72xf32, #tpu.memory_space<smem>>
    %c69 = arith.constant 69 : index
    %80 = memref.load %arg2[%c69] : memref<72xf32, #tpu.memory_space<smem>>
    %c70 = arith.constant 70 : index
    %81 = memref.load %arg2[%c70] : memref<72xf32, #tpu.memory_space<smem>>
    %c71 = arith.constant 71 : index
    %82 = memref.load %arg2[%c71] : memref<72xf32, #tpu.memory_space<smem>>
    %c0_0 = arith.constant 0 : index
    %c0_1 = arith.constant 0 : index
    %c0_2 = arith.constant 0 : index
    %83 = vector.load %arg1[%c0_0, %c0_1, %c0_2] : memref<2x8x256xf32, #tpu.memory_space<vmem>>, vector<1x8x256xf32>
    %84 = vector.shape_cast %83 : vector<1x8x256xf32> to vector<8x256xf32>
    %c1_3 = arith.constant 1 : index
    %c0_4 = arith.constant 0 : index
    %c0_5 = arith.constant 0 : index
    %85 = vector.load %arg1[%c1_3, %c0_4, %c0_5] : memref<2x8x256xf32, #tpu.memory_space<vmem>>, vector<1x8x256xf32>
    %86 = vector.shape_cast %85 : vector<1x8x256xf32> to vector<8x256xf32>
    %c0_6 = arith.constant 0 : index
    %87 = memref.load %arg3[%c0_6] : memref<4xf32, #tpu.memory_space<smem>>
    %88 = vector.broadcast %87 : f32 to vector<8x256xf32>
    %c1_7 = arith.constant 1 : index
    %89 = memref.load %arg3[%c1_7] : memref<4xf32, #tpu.memory_space<smem>>
    %90 = vector.broadcast %89 : f32 to vector<8x256xf32>
    %c2_8 = arith.constant 2 : index
    %91 = memref.load %arg3[%c2_8] : memref<4xf32, #tpu.memory_space<smem>>
    %92 = vector.broadcast %91 : f32 to vector<8x256xf32>
    %c3_9 = arith.constant 3 : index
    %93 = memref.load %arg3[%c3_9] : memref<4xf32, #tpu.memory_space<smem>>
    %94 = vector.broadcast %93 : f32 to vector<8x256xf32>
    %95 = arith.andi %4, %8 : vector<8x256xi1>
    %c17_i32 = arith.constant 17 : i32
    %96 = tpu.dynamic_rotate %84 by %c17_i32 dim 1 : vector<8x256xf32>, i32 -> vector<8x256xf32>
    %cst = arith.constant 0.000000e+00 : f32
    %97 = vector.broadcast %cst : f32 to vector<8x256xf32>
    %98 = arith.select %95, %96, %97 : vector<8x256xi1>, vector<8x256xf32>
    %99 = vector.broadcast %11 : f32 to vector<8x256xf32>
    %100 = arith.mulf %99, %98 : vector<8x256xf32>
    %101 = arith.addf %88, %100 : vector<8x256xf32>
    %102 = vector.broadcast %12 : f32 to vector<8x256xf32>
    %103 = arith.mulf %102, %98 : vector<8x256xf32>
    %104 = arith.addf %90, %103 : vector<8x256xf32>
    %105 = vector.broadcast %13 : f32 to vector<8x256xf32>
    %106 = arith.mulf %105, %98 : vector<8x256xf32>
    %107 = arith.addf %92, %106 : vector<8x256xf32>
    %108 = vector.broadcast %14 : f32 to vector<8x256xf32>
    %109 = arith.mulf %108, %98 : vector<8x256xf32>
    %110 = arith.addf %94, %109 : vector<8x256xf32>
    %c17_i32_10 = arith.constant 17 : i32
    %111 = tpu.dynamic_rotate %86 by %c17_i32_10 dim 1 : vector<8x256xf32>, i32 -> vector<8x256xf32>
    %cst_11 = arith.constant 0.000000e+00 : f32
    %112 = vector.broadcast %cst_11 : f32 to vector<8x256xf32>
    %113 = arith.select %95, %111, %112 : vector<8x256xi1>, vector<8x256xf32>
    %114 = vector.broadcast %15 : f32 to vector<8x256xf32>
    %115 = arith.mulf %114, %113 : vector<8x256xf32>
    %116 = arith.addf %101, %115 : vector<8x256xf32>
    %117 = vector.broadcast %16 : f32 to vector<8x256xf32>
    %118 = arith.mulf %117, %113 : vector<8x256xf32>
    %119 = arith.addf %104, %118 : vector<8x256xf32>
    %120 = vector.broadcast %17 : f32 to vector<8x256xf32>
    %121 = arith.mulf %120, %113 : vector<8x256xf32>
    %122 = arith.addf %107, %121 : vector<8x256xf32>
    %123 = vector.broadcast %18 : f32 to vector<8x256xf32>
    %124 = arith.mulf %123, %113 : vector<8x256xf32>
    %125 = arith.addf %110, %124 : vector<8x256xf32>
    %c16_i32_12 = arith.constant 16 : i32
    %126 = tpu.dynamic_rotate %84 by %c16_i32_12 dim 1 : vector<8x256xf32>, i32 -> vector<8x256xf32>
    %cst_13 = arith.constant 0.000000e+00 : f32
    %127 = vector.broadcast %cst_13 : f32 to vector<8x256xf32>
    %128 = arith.select %4, %126, %127 : vector<8x256xi1>, vector<8x256xf32>
    %129 = vector.broadcast %19 : f32 to vector<8x256xf32>
    %130 = arith.mulf %129, %128 : vector<8x256xf32>
    %131 = arith.addf %116, %130 : vector<8x256xf32>
    %132 = vector.broadcast %20 : f32 to vector<8x256xf32>
    %133 = arith.mulf %132, %128 : vector<8x256xf32>
    %134 = arith.addf %119, %133 : vector<8x256xf32>
    %135 = vector.broadcast %21 : f32 to vector<8x256xf32>
    %136 = arith.mulf %135, %128 : vector<8x256xf32>
    %137 = arith.addf %122, %136 : vector<8x256xf32>
    %138 = vector.broadcast %22 : f32 to vector<8x256xf32>
    %139 = arith.mulf %138, %128 : vector<8x256xf32>
    %140 = arith.addf %125, %139 : vector<8x256xf32>
    %c16_i32_14 = arith.constant 16 : i32
    %141 = tpu.dynamic_rotate %86 by %c16_i32_14 dim 1 : vector<8x256xf32>, i32 -> vector<8x256xf32>
    %cst_15 = arith.constant 0.000000e+00 : f32
    %142 = vector.broadcast %cst_15 : f32 to vector<8x256xf32>
    %143 = arith.select %4, %141, %142 : vector<8x256xi1>, vector<8x256xf32>
    %144 = vector.broadcast %23 : f32 to vector<8x256xf32>
    %145 = arith.mulf %144, %143 : vector<8x256xf32>
    %146 = arith.addf %131, %145 : vector<8x256xf32>
    %147 = vector.broadcast %24 : f32 to vector<8x256xf32>
    %148 = arith.mulf %147, %143 : vector<8x256xf32>
    %149 = arith.addf %134, %148 : vector<8x256xf32>
    %150 = vector.broadcast %25 : f32 to vector<8x256xf32>
    %151 = arith.mulf %150, %143 : vector<8x256xf32>
    %152 = arith.addf %137, %151 : vector<8x256xf32>
    %153 = vector.broadcast %26 : f32 to vector<8x256xf32>
    %154 = arith.mulf %153, %143 : vector<8x256xf32>
    %155 = arith.addf %140, %154 : vector<8x256xf32>
    %156 = arith.andi %4, %10 : vector<8x256xi1>
    %c15_i32_16 = arith.constant 15 : i32
    %157 = tpu.dynamic_rotate %84 by %c15_i32_16 dim 1 : vector<8x256xf32>, i32 -> vector<8x256xf32>
    %cst_17 = arith.constant 0.000000e+00 : f32
    %158 = vector.broadcast %cst_17 : f32 to vector<8x256xf32>
    %159 = arith.select %156, %157, %158 : vector<8x256xi1>, vector<8x256xf32>
    %160 = vector.broadcast %27 : f32 to vector<8x256xf32>
    %161 = arith.mulf %160, %159 : vector<8x256xf32>
    %162 = arith.addf %146, %161 : vector<8x256xf32>
    %163 = vector.broadcast %28 : f32 to vector<8x256xf32>
    %164 = arith.mulf %163, %159 : vector<8x256xf32>
    %165 = arith.addf %149, %164 : vector<8x256xf32>
    %166 = vector.broadcast %29 : f32 to vector<8x256xf32>
    %167 = arith.mulf %166, %159 : vector<8x256xf32>
    %168 = arith.addf %152, %167 : vector<8x256xf32>
    %169 = vector.broadcast %30 : f32 to vector<8x256xf32>
    %170 = arith.mulf %169, %159 : vector<8x256xf32>
    %171 = arith.addf %155, %170 : vector<8x256xf32>
    %c15_i32_18 = arith.constant 15 : i32
    %172 = tpu.dynamic_rotate %86 by %c15_i32_18 dim 1 : vector<8x256xf32>, i32 -> vector<8x256xf32>
    %cst_19 = arith.constant 0.000000e+00 : f32
    %173 = vector.broadcast %cst_19 : f32 to vector<8x256xf32>
    %174 = arith.select %156, %172, %173 : vector<8x256xi1>, vector<8x256xf32>
    %175 = vector.broadcast %31 : f32 to vector<8x256xf32>
    %176 = arith.mulf %175, %174 : vector<8x256xf32>
    %177 = arith.addf %162, %176 : vector<8x256xf32>
    %178 = vector.broadcast %32 : f32 to vector<8x256xf32>
    %179 = arith.mulf %178, %174 : vector<8x256xf32>
    %180 = arith.addf %165, %179 : vector<8x256xf32>
    %181 = vector.broadcast %33 : f32 to vector<8x256xf32>
    %182 = arith.mulf %181, %174 : vector<8x256xf32>
    %183 = arith.addf %168, %182 : vector<8x256xf32>
    %184 = vector.broadcast %34 : f32 to vector<8x256xf32>
    %185 = arith.mulf %184, %174 : vector<8x256xf32>
    %186 = arith.addf %171, %185 : vector<8x256xf32>
    %c1_i32_20 = arith.constant 1 : i32
    %187 = tpu.dynamic_rotate %84 by %c1_i32_20 dim 1 : vector<8x256xf32>, i32 -> vector<8x256xf32>
    %cst_21 = arith.constant 0.000000e+00 : f32
    %188 = vector.broadcast %cst_21 : f32 to vector<8x256xf32>
    %189 = arith.select %8, %187, %188 : vector<8x256xi1>, vector<8x256xf32>
    %190 = vector.broadcast %35 : f32 to vector<8x256xf32>
    %191 = arith.mulf %190, %189 : vector<8x256xf32>
    %192 = arith.addf %177, %191 : vector<8x256xf32>
    %193 = vector.broadcast %36 : f32 to vector<8x256xf32>
    %194 = arith.mulf %193, %189 : vector<8x256xf32>
    %195 = arith.addf %180, %194 : vector<8x256xf32>
    %196 = vector.broadcast %37 : f32 to vector<8x256xf32>
    %197 = arith.mulf %196, %189 : vector<8x256xf32>
    %198 = arith.addf %183, %197 : vector<8x256xf32>
    %199 = vector.broadcast %38 : f32 to vector<8x256xf32>
    %200 = arith.mulf %199, %189 : vector<8x256xf32>
    %201 = arith.addf %186, %200 : vector<8x256xf32>
    %c1_i32_22 = arith.constant 1 : i32
    %202 = tpu.dynamic_rotate %86 by %c1_i32_22 dim 1 : vector<8x256xf32>, i32 -> vector<8x256xf32>
    %cst_23 = arith.constant 0.000000e+00 : f32
    %203 = vector.broadcast %cst_23 : f32 to vector<8x256xf32>
    %204 = arith.select %8, %202, %203 : vector<8x256xi1>, vector<8x256xf32>
    %205 = vector.broadcast %39 : f32 to vector<8x256xf32>
    %206 = arith.mulf %205, %204 : vector<8x256xf32>
    %207 = arith.addf %192, %206 : vector<8x256xf32>
    %208 = vector.broadcast %40 : f32 to vector<8x256xf32>
    %209 = arith.mulf %208, %204 : vector<8x256xf32>
    %210 = arith.addf %195, %209 : vector<8x256xf32>
    %211 = vector.broadcast %41 : f32 to vector<8x256xf32>
    %212 = arith.mulf %211, %204 : vector<8x256xf32>
    %213 = arith.addf %198, %212 : vector<8x256xf32>
    %214 = vector.broadcast %42 : f32 to vector<8x256xf32>
    %215 = arith.mulf %214, %204 : vector<8x256xf32>
    %216 = arith.addf %201, %215 : vector<8x256xf32>
    %217 = vector.broadcast %43 : f32 to vector<8x256xf32>
    %218 = arith.mulf %217, %84 : vector<8x256xf32>
    %219 = arith.addf %207, %218 : vector<8x256xf32>
    %220 = vector.broadcast %44 : f32 to vector<8x256xf32>
    %221 = arith.mulf %220, %84 : vector<8x256xf32>
    %222 = arith.addf %210, %221 : vector<8x256xf32>
    %223 = vector.broadcast %45 : f32 to vector<8x256xf32>
    %224 = arith.mulf %223, %84 : vector<8x256xf32>
    %225 = arith.addf %213, %224 : vector<8x256xf32>
    %226 = vector.broadcast %46 : f32 to vector<8x256xf32>
    %227 = arith.mulf %226, %84 : vector<8x256xf32>
    %228 = arith.addf %216, %227 : vector<8x256xf32>
    %229 = vector.broadcast %47 : f32 to vector<8x256xf32>
    %230 = arith.mulf %229, %86 : vector<8x256xf32>
    %231 = arith.addf %219, %230 : vector<8x256xf32>
    %232 = vector.broadcast %48 : f32 to vector<8x256xf32>
    %233 = arith.mulf %232, %86 : vector<8x256xf32>
    %234 = arith.addf %222, %233 : vector<8x256xf32>
    %235 = vector.broadcast %49 : f32 to vector<8x256xf32>
    %236 = arith.mulf %235, %86 : vector<8x256xf32>
    %237 = arith.addf %225, %236 : vector<8x256xf32>
    %238 = vector.broadcast %50 : f32 to vector<8x256xf32>
    %239 = arith.mulf %238, %86 : vector<8x256xf32>
    %240 = arith.addf %228, %239 : vector<8x256xf32>
    %c255_i32 = arith.constant 255 : i32
    %241 = tpu.dynamic_rotate %84 by %c255_i32 dim 1 : vector<8x256xf32>, i32 -> vector<8x256xf32>
    %cst_24 = arith.constant 0.000000e+00 : f32
    %242 = vector.broadcast %cst_24 : f32 to vector<8x256xf32>
    %243 = arith.select %10, %241, %242 : vector<8x256xi1>, vector<8x256xf32>
    %244 = vector.broadcast %51 : f32 to vector<8x256xf32>
    %245 = arith.mulf %244, %243 : vector<8x256xf32>
    %246 = arith.addf %231, %245 : vector<8x256xf32>
    %247 = vector.broadcast %52 : f32 to vector<8x256xf32>
    %248 = arith.mulf %247, %243 : vector<8x256xf32>
    %249 = arith.addf %234, %248 : vector<8x256xf32>
    %250 = vector.broadcast %53 : f32 to vector<8x256xf32>
    %251 = arith.mulf %250, %243 : vector<8x256xf32>
    %252 = arith.addf %237, %251 : vector<8x256xf32>
    %253 = vector.broadcast %54 : f32 to vector<8x256xf32>
    %254 = arith.mulf %253, %243 : vector<8x256xf32>
    %255 = arith.addf %240, %254 : vector<8x256xf32>
    %c255_i32_25 = arith.constant 255 : i32
    %256 = tpu.dynamic_rotate %86 by %c255_i32_25 dim 1 : vector<8x256xf32>, i32 -> vector<8x256xf32>
    %cst_26 = arith.constant 0.000000e+00 : f32
    %257 = vector.broadcast %cst_26 : f32 to vector<8x256xf32>
    %258 = arith.select %10, %256, %257 : vector<8x256xi1>, vector<8x256xf32>
    %259 = vector.broadcast %55 : f32 to vector<8x256xf32>
    %260 = arith.mulf %259, %258 : vector<8x256xf32>
    %261 = arith.addf %246, %260 : vector<8x256xf32>
    %262 = vector.broadcast %56 : f32 to vector<8x256xf32>
    %263 = arith.mulf %262, %258 : vector<8x256xf32>
    %264 = arith.addf %249, %263 : vector<8x256xf32>
    %265 = vector.broadcast %57 : f32 to vector<8x256xf32>
    %266 = arith.mulf %265, %258 : vector<8x256xf32>
    %267 = arith.addf %252, %266 : vector<8x256xf32>
    %268 = vector.broadcast %58 : f32 to vector<8x256xf32>
    %269 = arith.mulf %268, %258 : vector<8x256xf32>
    %270 = arith.addf %255, %269 : vector<8x256xf32>
    %271 = arith.andi %6, %8 : vector<8x256xi1>
    %c241_i32 = arith.constant 241 : i32
    %272 = tpu.dynamic_rotate %84 by %c241_i32 dim 1 : vector<8x256xf32>, i32 -> vector<8x256xf32>
    %cst_27 = arith.constant 0.000000e+00 : f32
    %273 = vector.broadcast %cst_27 : f32 to vector<8x256xf32>
    %274 = arith.select %271, %272, %273 : vector<8x256xi1>, vector<8x256xf32>
    %275 = vector.broadcast %59 : f32 to vector<8x256xf32>
    %276 = arith.mulf %275, %274 : vector<8x256xf32>
    %277 = arith.addf %261, %276 : vector<8x256xf32>
    %278 = vector.broadcast %60 : f32 to vector<8x256xf32>
    %279 = arith.mulf %278, %274 : vector<8x256xf32>
    %280 = arith.addf %264, %279 : vector<8x256xf32>
    %281 = vector.broadcast %61 : f32 to vector<8x256xf32>
    %282 = arith.mulf %281, %274 : vector<8x256xf32>
    %283 = arith.addf %267, %282 : vector<8x256xf32>
    %284 = vector.broadcast %62 : f32 to vector<8x256xf32>
    %285 = arith.mulf %284, %274 : vector<8x256xf32>
    %286 = arith.addf %270, %285 : vector<8x256xf32>
    %c241_i32_28 = arith.constant 241 : i32
    %287 = tpu.dynamic_rotate %86 by %c241_i32_28 dim 1 : vector<8x256xf32>, i32 -> vector<8x256xf32>
    %cst_29 = arith.constant 0.000000e+00 : f32
    %288 = vector.broadcast %cst_29 : f32 to vector<8x256xf32>
    %289 = arith.select %271, %287, %288 : vector<8x256xi1>, vector<8x256xf32>
    %290 = vector.broadcast %63 : f32 to vector<8x256xf32>
    %291 = arith.mulf %290, %289 : vector<8x256xf32>
    %292 = arith.addf %277, %291 : vector<8x256xf32>
    %293 = vector.broadcast %64 : f32 to vector<8x256xf32>
    %294 = arith.mulf %293, %289 : vector<8x256xf32>
    %295 = arith.addf %280, %294 : vector<8x256xf32>
    %296 = vector.broadcast %65 : f32 to vector<8x256xf32>
    %297 = arith.mulf %296, %289 : vector<8x256xf32>
    %298 = arith.addf %283, %297 : vector<8x256xf32>
    %299 = vector.broadcast %66 : f32 to vector<8x256xf32>
    %300 = arith.mulf %299, %289 : vector<8x256xf32>
    %301 = arith.addf %286, %300 : vector<8x256xf32>
    %c240_i32_30 = arith.constant 240 : i32
    %302 = tpu.dynamic_rotate %84 by %c240_i32_30 dim 1 : vector<8x256xf32>, i32 -> vector<8x256xf32>
    %cst_31 = arith.constant 0.000000e+00 : f32
    %303 = vector.broadcast %cst_31 : f32 to vector<8x256xf32>
    %304 = arith.select %6, %302, %303 : vector<8x256xi1>, vector<8x256xf32>
    %305 = vector.broadcast %67 : f32 to vector<8x256xf32>
    %306 = arith.mulf %305, %304 : vector<8x256xf32>
    %307 = arith.addf %292, %306 : vector<8x256xf32>
    %308 = vector.broadcast %68 : f32 to vector<8x256xf32>
    %309 = arith.mulf %308, %304 : vector<8x256xf32>
    %310 = arith.addf %295, %309 : vector<8x256xf32>
    %311 = vector.broadcast %69 : f32 to vector<8x256xf32>
    %312 = arith.mulf %311, %304 : vector<8x256xf32>
    %313 = arith.addf %298, %312 : vector<8x256xf32>
    %314 = vector.broadcast %70 : f32 to vector<8x256xf32>
    %315 = arith.mulf %314, %304 : vector<8x256xf32>
    %316 = arith.addf %301, %315 : vector<8x256xf32>
    %c240_i32_32 = arith.constant 240 : i32
    %317 = tpu.dynamic_rotate %86 by %c240_i32_32 dim 1 : vector<8x256xf32>, i32 -> vector<8x256xf32>
    %cst_33 = arith.constant 0.000000e+00 : f32
    %318 = vector.broadcast %cst_33 : f32 to vector<8x256xf32>
    %319 = arith.select %6, %317, %318 : vector<8x256xi1>, vector<8x256xf32>
    %320 = vector.broadcast %71 : f32 to vector<8x256xf32>
    %321 = arith.mulf %320, %319 : vector<8x256xf32>
    %322 = arith.addf %307, %321 : vector<8x256xf32>
    %323 = vector.broadcast %72 : f32 to vector<8x256xf32>
    %324 = arith.mulf %323, %319 : vector<8x256xf32>
    %325 = arith.addf %310, %324 : vector<8x256xf32>
    %326 = vector.broadcast %73 : f32 to vector<8x256xf32>
    %327 = arith.mulf %326, %319 : vector<8x256xf32>
    %328 = arith.addf %313, %327 : vector<8x256xf32>
    %329 = vector.broadcast %74 : f32 to vector<8x256xf32>
    %330 = arith.mulf %329, %319 : vector<8x256xf32>
    %331 = arith.addf %316, %330 : vector<8x256xf32>
    %332 = arith.andi %6, %10 : vector<8x256xi1>
    %c239_i32 = arith.constant 239 : i32
    %333 = tpu.dynamic_rotate %84 by %c239_i32 dim 1 : vector<8x256xf32>, i32 -> vector<8x256xf32>
    %cst_34 = arith.constant 0.000000e+00 : f32
    %334 = vector.broadcast %cst_34 : f32 to vector<8x256xf32>
    %335 = arith.select %332, %333, %334 : vector<8x256xi1>, vector<8x256xf32>
    %336 = vector.broadcast %75 : f32 to vector<8x256xf32>
    %337 = arith.mulf %336, %335 : vector<8x256xf32>
    %338 = arith.addf %322, %337 : vector<8x256xf32>
    %339 = vector.broadcast %76 : f32 to vector<8x256xf32>
    %340 = arith.mulf %339, %335 : vector<8x256xf32>
    %341 = arith.addf %325, %340 : vector<8x256xf32>
    %342 = vector.broadcast %77 : f32 to vector<8x256xf32>
    %343 = arith.mulf %342, %335 : vector<8x256xf32>
    %344 = arith.addf %328, %343 : vector<8x256xf32>
    %345 = vector.broadcast %78 : f32 to vector<8x256xf32>
    %346 = arith.mulf %345, %335 : vector<8x256xf32>
    %347 = arith.addf %331, %346 : vector<8x256xf32>
    %c239_i32_35 = arith.constant 239 : i32
    %348 = tpu.dynamic_rotate %86 by %c239_i32_35 dim 1 : vector<8x256xf32>, i32 -> vector<8x256xf32>
    %cst_36 = arith.constant 0.000000e+00 : f32
    %349 = vector.broadcast %cst_36 : f32 to vector<8x256xf32>
    %350 = arith.select %332, %348, %349 : vector<8x256xi1>, vector<8x256xf32>
    %351 = vector.broadcast %79 : f32 to vector<8x256xf32>
    %352 = arith.mulf %351, %350 : vector<8x256xf32>
    %353 = arith.addf %338, %352 : vector<8x256xf32>
    %354 = vector.broadcast %80 : f32 to vector<8x256xf32>
    %355 = arith.mulf %354, %350 : vector<8x256xf32>
    %356 = arith.addf %341, %355 : vector<8x256xf32>
    %357 = vector.broadcast %81 : f32 to vector<8x256xf32>
    %358 = arith.mulf %357, %350 : vector<8x256xf32>
    %359 = arith.addf %344, %358 : vector<8x256xf32>
    %360 = vector.broadcast %82 : f32 to vector<8x256xf32>
    %361 = arith.mulf %360, %350 : vector<8x256xf32>
    %362 = arith.addf %347, %361 : vector<8x256xf32>
    %c0_37 = arith.constant 0 : index
    %c0_38 = arith.constant 0 : index
    %c0_39 = arith.constant 0 : index
    %363 = vector.load %arg4[%c0_37, %c0_38, %c0_39] : memref<4x8x256xf32, #tpu.memory_space<vmem>>, vector<1x8x256xf32>
    %364 = vector.shape_cast %363 : vector<1x8x256xf32> to vector<8x256xf32>
    %365 = vector.shape_cast %353 : vector<8x256xf32> to vector<1x8x256xf32>
    tpu.vector_store %arg4[%c0_37, %c0_38, %c0_39], %365 {strides = array<i32>} : memref<4x8x256xf32, #tpu.memory_space<vmem>>, vector<1x8x256xf32>,
    %c1_40 = arith.constant 1 : index
    %c0_41 = arith.constant 0 : index
    %c0_42 = arith.constant 0 : index
    %366 = vector.load %arg4[%c1_40, %c0_41, %c0_42] : memref<4x8x256xf32, #tpu.memory_space<vmem>>, vector<1x8x256xf32>
    %367 = vector.shape_cast %366 : vector<1x8x256xf32> to vector<8x256xf32>
    %368 = vector.shape_cast %356 : vector<8x256xf32> to vector<1x8x256xf32>
    tpu.vector_store %arg4[%c1_40, %c0_41, %c0_42], %368 {strides = array<i32>} : memref<4x8x256xf32, #tpu.memory_space<vmem>>, vector<1x8x256xf32>,
    %c2_43 = arith.constant 2 : index
    %c0_44 = arith.constant 0 : index
    %c0_45 = arith.constant 0 : index
    %369 = vector.load %arg4[%c2_43, %c0_44, %c0_45] : memref<4x8x256xf32, #tpu.memory_space<vmem>>, vector<1x8x256xf32>
    %370 = vector.shape_cast %369 : vector<1x8x256xf32> to vector<8x256xf32>
    %371 = vector.shape_cast %359 : vector<8x256xf32> to vector<1x8x256xf32>
    tpu.vector_store %arg4[%c2_43, %c0_44, %c0_45], %371 {strides = array<i32>} : memref<4x8x256xf32, #tpu.memory_space<vmem>>, vector<1x8x256xf32>,
    %c3_46 = arith.constant 3 : index
    %c0_47 = arith.constant 0 : index
    %c0_48 = arith.constant 0 : index
    %372 = vector.load %arg4[%c3_46, %c0_47, %c0_48] : memref<4x8x256xf32, #tpu.memory_space<vmem>>, vector<1x8x256xf32>
    %373 = vector.shape_cast %372 : vector<1x8x256xf32> to vector<8x256xf32>
    %374 = vector.shape_cast %362 : vector<8x256xf32> to vector<1x8x256xf32>
    tpu.vector_store %arg4[%c3_46, %c0_47, %c0_48], %374 {strides = array<i32>} : memref<4x8x256xf32, #tpu.memory_space<vmem>>, vector<1x8x256xf32>,
    return
  }
  func.func @transform_0(%arg0: i32) -> (i32, i32, i32) {
    %c0_i32 = arith.constant 0 : i32
    %c0_i32_0 = arith.constant 0 : i32
    %c0_i32_1 = arith.constant 0 : i32
    return %c0_i32, %arg0, %c0_i32_0 : i32, i32, i32
  }
  func.func @transform_1(%arg0: i32) -> i32 {
    %c0_i32 = arith.constant 0 : i32
    %c0_i32_0 = arith.constant 0 : i32
    return %c0_i32 : i32
  }
  func.func @transform_2(%arg0: i32) -> i32 {
    %c0_i32 = arith.constant 0 : i32
    %c0_i32_0 = arith.constant 0 : i32
    return %c0_i32 : i32
  }
  func.func @transform_3(%arg0: i32) -> (i32, i32, i32) {
    %c0_i32 = arith.constant 0 : i32
    %c0_i32_0 = arith.constant 0 : i32
    %c0_i32_1 = arith.constant 0 : i32
    return %c0_i32, %arg0, %c0_i32_0 : i32, i32, i32
  }
}

</mosaic_0001>

<llo_original>
// kernel: multi_coil_forward.1
$region0: #{multi_coil_forward.1}
  #allocation0 [shape = 'u32[]', space=smem, size = 0x4, offset = 0x4, fixed_abs, tag = 'smem constant byte address 0x4 - core index']
  #allocation1 [shape = 'u32[144,128]{1,0:T(1,128)}', space=vmem, size = 0x12000, scoped, tag = 'internal scratch']
  %s0 = inlined_call_operand.vmem [shape: f32[2,8,256], index: 0, kind: input, shape index: {}]
  %s1 = inlined_call_operand.vmem [shape: f32[72], index: 1, kind: input, shape index: {}]
  %s2 = inlined_call_operand.vmem [shape: f32[4], index: 2, kind: input, shape index: {}]
  %s3 = inlined_call_operand.vmem [shape: f32[4,8,256], index: 3, kind: output, shape index: {}]
  %s4 = sld [smem:[#allocation0]]
  $region30: #{multi_coil_forward.1} parent=0
    _
  %s6 = ssub.s32 1, %s4
  %s7 = scalar_select 0, %s6, %s4
  $region1: #{multi_coil_forward.1} parent=0
    #allocation2 [shape = 'u8[512]{0}', space=smem, size = 0x200, scoped, tag = 'input window, operand 1, single buffered']
    #allocation3 [shape = 's32[1]{0}', space=sflag, size = 0x4, scoped, tag = 'scoped memory for multi_coil_forward.1']
    #allocation4 [shape = 'u8[512]{0}', space=smem, size = 0x200, scoped, tag = 'input window, operand 2, single buffered']
    #allocation5 [shape = 's32[1]{0}', space=sflag, size = 0x4, scoped, tag = 'scoped memory for multi_coil_forward.1']
    %8 = vsyncpa [#allocation3], 0
    %9 = vsyncpa [#allocation5], 0
    // Predicated region
    $region2: #{multi_coil_forward.1} parent=1 // pred_check
      _
    $region3: #{multi_coil_forward.1} parent=1 // pred_check_branch
      %11 = sbr.rel (0) target = $region5
    $region4: #{multi_coil_forward.1} parent=1 // pred_region
      _
    $region5: #{multi_coil_forward.1} parent=1 // pred_fallthru
      _
    // Predicated region
    $region6: #{multi_coil_forward.1} parent=1 // pred_check
      _
    $region7: #{multi_coil_forward.1} parent=1 // pred_check_branch
      %13 = sbr.rel (0) target = $region9
    $region8: #{multi_coil_forward.1} parent=1 // pred_region
      %s15 = ssub.s32 16, 16
      %16 = vsyncadd [#allocation3], %s15
      %s18 = sshll.u32 %s1, 4
      %s19 = int_to_ptr.vmem [resolvable:$true] %s18
      %21 = dma.vmem_to_smem %s19, 16, [#allocation2], [#allocation3]
    $region9: #{multi_coil_forward.1} parent=1 // pred_fallthru
      _
    // Predicated region
    $region10: #{multi_coil_forward.1} parent=1 // pred_check
      _
    $region11: #{multi_coil_forward.1} parent=1 // pred_check_branch
      %23 = sbr.rel (0) target = $region13
    $region12: #{multi_coil_forward.1} parent=1 // pred_region
      %s25 = ssub.s32 16, 16
      %26 = vsyncadd [#allocation5], %s25
      %s28 = sshll.u32 %s2, 4
      %s29 = int_to_ptr.vmem [resolvable:$true] %s28
      %31 = dma.vmem_to_smem %s29, 16, [#allocation4], [#allocation5]
    $region13: #{multi_coil_forward.1} parent=1 // pred_fallthru
      _
    // Predicated region
    $region14: #{multi_coil_forward.1} parent=1 // pred_check
      _
    $region15: #{multi_coil_forward.1} parent=1 // pred_check_branch
      %33 = sbr.rel (0) target = $region17
    $region16: #{multi_coil_forward.1} parent=1 // pred_region
      %34 = dma.done [#allocation3], 16
    $region17: #{multi_coil_forward.1} parent=1 // pred_fallthru
      _
    // Predicated region
    $region18: #{multi_coil_forward.1} parent=1 // pred_check
      _
    $region19: #{multi_coil_forward.1} parent=1 // pred_check_branch
      %36 = sbr.rel (0) target = $region21
    $region20: #{multi_coil_forward.1} parent=1 // pred_region
      %37 = dma.done [#allocation5], 16
    $region21: #{multi_coil_forward.1} parent=1 // pred_fallthru
      _
    %38 = sfence
    %v39 = vlaneseq
    %v40 = vand.u32 %v39, 127
    %v41 = vadd.s32 %v40, 128
    %v42 = vand.u32 %v40, 15
    %v43 = vand.u32 %v41, 15
    %vm44 = vcmp.ge.s32.totalorder %v40, 16
    %vm45 = vcmp.ge.s32.totalorder %v41, 16
    %vm46 = vcmp.lt.s32.totalorder %v40, 240
    %vm47 = vcmp.lt.s32.totalorder %v41, 240
    %vm48 = vcmp.ge.s32.totalorder %v42, 1
    %vm49 = vcmp.ge.s32.totalorder %v43, 1
    %vm50 = vcmp.le.s32.totalorder %v42, 14
    %vm51 = vcmp.le.s32.totalorder %v43, 14
    %s52 = sld [smem:[#allocation2]]
    %s53 = sld [smem:[#allocation2 + $0x1]]
    %s54 = sld [smem:[#allocation2 + $0x2]]
    %s55 = sld [smem:[#allocation2 + $0x3]]
    %s56 = sld [smem:[#allocation2 + $0x4]]
    %s57 = sld [smem:[#allocation2 + $0x5]]
    %s58 = sld [smem:[#allocation2 + $0x6]]
    %s59 = sld [smem:[#allocation2 + $0x7]]
    %s60 = sld [smem:[#allocation2 + $0x8]]
    %s61 = sld [smem:[#allocation2 + $0x9]]
    %s62 = sld [smem:[#allocation2 + $0xa]]
    %s63 = sld [smem:[#allocation2 + $0xb]]
    %s64 = sld [smem:[#allocation2 + $0xc]]
    %s65 = sld [smem:[#allocation2 + $0xd]]
    %s66 = sld [smem:[#allocation2 + $0xe]]
    %s67 = sld [smem:[#allocation2 + $0xf]]
    %s68 = sld [smem:[#allocation2 + $0x10]]
    %s69 = sld [smem:[#allocation2 + $0x11]]
    %s70 = sld [smem:[#allocation2 + $0x12]]
    %s71 = sld [smem:[#allocation2 + $0x13]]
    %s72 = sld [smem:[#allocation2 + $0x14]]
    %s73 = sld [smem:[#allocation2 + $0x15]]
    %s74 = sld [smem:[#allocation2 + $0x16]]
    %s75 = sld [smem:[#allocation2 + $0x17]]
    %s76 = sld [smem:[#allocation2 + $0x18]]
    %s77 = sld [smem:[#allocation2 + $0x19]]
    %s78 = sld [smem:[#allocation2 + $0x1a]]
    %s79 = sld [smem:[#allocation2 + $0x1b]]
    %s80 = sld [smem:[#allocation2 + $0x1c]]
    %s81 = sld [smem:[#allocation2 + $0x1d]]
    %s82 = sld [smem:[#allocation2 + $0x1e]]
    %s83 = sld [smem:[#allocation2 + $0x1f]]
    %s84 = sld [smem:[#allocation2 + $0x20]]
    %s85 = sld [smem:[#allocation2 + $0x21]]
    %s86 = sld [smem:[#allocation2 + $0x22]]
    %s87 = sld [smem:[#allocation2 + $0x23]]
    %s88 = sld [smem:[#allocation2 + $0x24]]
    %s89 = sld [smem:[#allocation2 + $0x25]]
    %s90 = sld [smem:[#allocation2 + $0x26]]
    %s91 = sld [smem:[#allocation2 + $0x27]]
    %s92 = sld [smem:[#allocation2 + $0x28]]
    %s93 = sld [smem:[#allocation2 + $0x29]]
    %s94 = sld [smem:[#allocation2 + $0x2a]]
    %s95 = sld [smem:[#allocation2 + $0x2b]]
    %s96 = sld [smem:[#allocation2 + $0x2c]]
    %s97 = sld [smem:[#allocation2 + $0x2d]]
    %s98 = sld [smem:[#allocation2 + $0x2e]]
    %s99 = sld [smem:[#allocation2 + $0x2f]]
    %s100 = sld [smem:[#allocation2 + $0x30]]
    %s101 = sld [smem:[#allocation2 + $0x31]]
    %s102 = sld [smem:[#allocation2 + $0x32]]
    %s103 = sld [smem:[#allocation2 + $0x33]]
    %s104 = sld [smem:[#allocation2 + $0x34]]
    %s105 = sld [smem:[#allocation2 + $0x35]]
    %s106 = sld [smem:[#allocation2 + $0x36]]
    %s107 = sld [smem:[#allocation2 + $0x37]]
    %s108 = sld [smem:[#allocation2 + $0x38]]
    %s109 = sld [smem:[#allocation2 + $0x39]]
    %s110 = sld [smem:[#allocation2 + $0x3a]]
    %s111 = sld [smem:[#allocation2 + $0x3b]]
    %s112 = sld [smem:[#allocation2 + $0x3c]]
    %s113 = sld [smem:[#allocation2 + $0x3d]]
    %s114 = sld [smem:[#allocation2 + $0x3e]]
    %s115 = sld [smem:[#allocation2 + $0x3f]]
    %s116 = sld [smem:[#allocation2 + $0x40]]
    %s117 = sld [smem:[#allocation2 + $0x41]]
    %s118 = sld [smem:[#allocation2 + $0x42]]
    %s119 = sld [smem:[#allocation2 + $0x43]]
    %s120 = sld [smem:[#allocation2 + $0x44]]
    %s121 = sld [smem:[#allocation2 + $0x45]]
    %s122 = sld [smem:[#allocation2 + $0x46]]
    %s123 = sld [smem:[#allocation2 + $0x47]]
    %v124 = vld [vmem:[%s0] sm:$0xff]
    %v125 = vld [vmem:[%s0 + $0x8] sm:$0xff]
    %s126 = scalar_lea.vmem %s0, 16
    %v127 = vld [vmem:[%s126] sm:$0xff]
    %v128 = vld [vmem:[%s126 + $0x8] sm:$0xff]
    %s129 = sld [smem:[#allocation4]]
    %v130 = vstv %s129
    %s131 = sld [smem:[#allocation4 + $0x1]]
    %v132 = vstv %s131
    %s133 = sld [smem:[#allocation4 + $0x2]]
    %v134 = vstv %s133
    %s135 = sld [smem:[#allocation4 + $0x3]]
    %v136 = vstv %s135
    %vm137 = vmand %vm44, %vm48
    %vm138 = vmand %vm45, %vm49
    %139 = vrot.lane.b32.xlu0 %v124, 17
    %v140 = vpop.permute.xlu0 %139
    %141 = vrot.lane.b32.xlu0 %v125, 17
    %v142 = vpop.permute.xlu0 %141
    %vm143 = vcmp.lt.s32.totalorder %v40, 17
    %v144 = vsel %vm143, %v140, %v142
    %v145 = vsel %vm143, %v142, %v140
    %v146 = vsel %vm137, %v145, 0.0
    %v147 = vsel %vm138, %v144, 0.0
    %v148 = vstv %s52
    %v149 = vmul.f32 %v148, %v146
    %v150 = vmul.f32 %v148, %v147
    %v151 = vadd.f32 %v130, %v149
    %v152 = vadd.f32 %v130, %v150
    %v153 = vstv %s53
    %v154 = vmul.f32 %v153, %v146
    %v155 = vmul.f32 %v153, %v147
    %v156 = vadd.f32 %v132, %v154
    %v157 = vadd.f32 %v132, %v155
    %v158 = vstv %s54
    %v159 = vmul.f32 %v158, %v146
    %v160 = vmul.f32 %v158, %v147
    %v161 = vadd.f32 %v134, %v159
    %v162 = vadd.f32 %v134, %v160
    %v163 = vstv %s55
    %v164 = vmul.f32 %v163, %v146
    %v165 = vmul.f32 %v163, %v147
    %v166 = vadd.f32 %v136, %v164
    %v167 = vadd.f32 %v136, %v165
    %168 = vrot.lane.b32.xlu0 %v127, 17
    %v169 = vpop.permute.xlu0 %168
    %170 = vrot.lane.b32.xlu0 %v128, 17
    %v171 = vpop.permute.xlu0 %170
    %v172 = vsel %vm143, %v169, %v171
    %v173 = vsel %vm143, %v171, %v169
    %v174 = vsel %vm137, %v173, 0.0
    %v175 = vsel %vm138, %v172, 0.0
    %v176 = vstv %s56
    %v177 = vmul.f32 %v176, %v174
    %v178 = vmul.f32 %v176, %v175
    %v179 = vadd.f32 %v151, %v177
    %v180 = vadd.f32 %v152, %v178
    %v181 = vstv %s57
    %v182 = vmul.f32 %v181, %v174
    %v183 = vmul.f32 %v181, %v175
    %v184 = vadd.f32 %v156, %v182
    %v185 = vadd.f32 %v157, %v183
    %v186 = vstv %s58
    %v187 = vmul.f32 %v186, %v174
    %v188 = vmul.f32 %v186, %v175
    %v189 = vadd.f32 %v161, %v187
    %v190 = vadd.f32 %v162, %v188
    %v191 = vstv %s59
    %v192 = vmul.f32 %v191, %v174
    %v193 = vmul.f32 %v191, %v175
    %v194 = vadd.f32 %v166, %v192
    %v195 = vadd.f32 %v167, %v193
    %196 = vrot.lane.b32.xlu0 %v124, 16
    %v197 = vpop.permute.xlu0 %196
    %198 = vrot.lane.b32.xlu0 %v125, 16
    %v199 = vpop.permute.xlu0 %198
    %vm200 = vcmp.lt.s32.totalorder %v40, 16
    %v201 = vsel %vm200, %v197, %v199
    %v202 = vsel %vm200, %v199, %v197
    %v203 = vsel %vm44, %v202, 0.0
    %v204 = vsel %vm45, %v201, 0.0
    %v205 = vstv %s60
    %v206 = vmul.f32 %v205, %v203
    %v207 = vmul.f32 %v205, %v204
    %v208 = vadd.f32 %v179, %v206
    %v209 = vadd.f32 %v180, %v207
    %v210 = vstv %s61
    %v211 = vmul.f32 %v210, %v203
    %v212 = vmul.f32 %v210, %v204
    %v213 = vadd.f32 %v184, %v211
    %v214 = vadd.f32 %v185, %v212
    %v215 = vstv %s62
    %v216 = vmul.f32 %v215, %v203
    %v217 = vmul.f32 %v215, %v204
    %v218 = vadd.f32 %v189, %v216
    %v219 = vadd.f32 %v190, %v217
    %v220 = vstv %s63
    %v221 = vmul.f32 %v220, %v203
    %v222 = vmul.f32 %v220, %v204
    %v223 = vadd.f32 %v194, %v221
    %v224 = vadd.f32 %v195, %v222
    %225 = vrot.lane.b32.xlu0 %v127, 16
    %v226 = vpop.permute.xlu0 %225
    %227 = vrot.lane.b32.xlu0 %v128, 16
    %v228 = vpop.permute.xlu0 %227
    %v229 = vsel %vm200, %v226, %v228
    %v230 = vsel %vm200, %v228, %v226
    %v231 = vsel %vm44, %v230, 0.0
    %v232 = vsel %vm45, %v229, 0.0
    %v233 = vstv %s64
    %v234 = vmul.f32 %v233, %v231
    %v235 = vmul.f32 %v233, %v232
    %v236 = vadd.f32 %v208, %v234
    %v237 = vadd.f32 %v209, %v235
    %v238 = vstv %s65
    %v239 = vmul.f32 %v238, %v231
    %v240 = vmul.f32 %v238, %v232
    %v241 = vadd.f32 %v213, %v239
    %v242 = vadd.f32 %v214, %v240
    %v243 = vstv %s66
    %v244 = vmul.f32 %v243, %v231
    %v245 = vmul.f32 %v243, %v232
    %v246 = vadd.f32 %v218, %v244
    %v247 = vadd.f32 %v219, %v245
    %v248 = vstv %s67
    %v249 = vmul.f32 %v248, %v231
    %v250 = vmul.f32 %v248, %v232
    %v251 = vadd.f32 %v223, %v249
    %v252 = vadd.f32 %v224, %v250
    %vm253 = vmand %vm44, %vm50
    %vm254 = vmand %vm45, %vm51
    %255 = vrot.lane.b32.xlu0 %v124, 15
    %v256 = vpop.permute.xlu0 %255
    %257 = vrot.lane.b32.xlu0 %v125, 15
    %v258 = vpop.permute.xlu0 %257
    %vm259 = vcmp.lt.s32.totalorder %v40, 15
    %v260 = vsel %vm259, %v256, %v258
    %v261 = vsel %vm259, %v258, %v256
    %v262 = vsel %vm253, %v261, 0.0
    %v263 = vsel %vm254, %v260, 0.0
    %v264 = vstv %s68
    %v265 = vmul.f32 %v264, %v262
    %v266 = vmul.f32 %v264, %v263
    %v267 = vadd.f32 %v236, %v265
    %v268 = vadd.f32 %v237, %v266
    %v269 = vstv %s69
    %v270 = vmul.f32 %v269, %v262
    %v271 = vmul.f32 %v269, %v263
    %v272 = vadd.f32 %v241, %v270
    %v273 = vadd.f32 %v242, %v271
    %v274 = vstv %s70
    %v275 = vmul.f32 %v274, %v262
    %v276 = vmul.f32 %v274, %v263
    %v277 = vadd.f32 %v246, %v275
    %v278 = vadd.f32 %v247, %v276
    %v279 = vstv %s71
    %v280 = vmul.f32 %v279, %v262
    %v281 = vmul.f32 %v279, %v263
    %v282 = vadd.f32 %v251, %v280
    %v283 = vadd.f32 %v252, %v281
    %284 = vrot.lane.b32.xlu0 %v127, 15
    %v285 = vpop.permute.xlu0 %284
    %286 = vrot.lane.b32.xlu0 %v128, 15
    %v287 = vpop.permute.xlu0 %286
    %v288 = vsel %vm259, %v285, %v287
    %v289 = vsel %vm259, %v287, %v285
    %v290 = vsel %vm253, %v289, 0.0
    %v291 = vsel %vm254, %v288, 0.0
    %v292 = vstv %s72
    %v293 = vmul.f32 %v292, %v290
    %v294 = vmul.f32 %v292, %v291
    %v295 = vadd.f32 %v267, %v293
    %v296 = vadd.f32 %v268, %v294
    %v297 = vstv %s73
    %v298 = vmul.f32 %v297, %v290
    %v299 = vmul.f32 %v297, %v291
    %v300 = vadd.f32 %v272, %v298
    %v301 = vadd.f32 %v273, %v299
    %v302 = vstv %s74
    %v303 = vmul.f32 %v302, %v290
    %v304 = vmul.f32 %v302, %v291
    %v305 = vadd.f32 %v277, %v303
    %v306 = vadd.f32 %v278, %v304
    %v307 = vstv %s75
    %v308 = vmul.f32 %v307, %v290
    %v309 = vmul.f32 %v307, %v291
    %v310 = vadd.f32 %v282, %v308
    %v311 = vadd.f32 %v283, %v309
    %312 = vrot.lane.b32.xlu0 %v124, 1
    %v313 = vpop.permute.xlu0 %312
    %314 = vrot.lane.b32.xlu0 %v125, 1
    %v315 = vpop.permute.xlu0 %314
    %vm316 = vcmp.lt.s32.totalorder %v40, 1
    %v317 = vsel %vm316, %v313, %v315
    %v318 = vsel %vm316, %v315, %v313
    %v319 = vsel %vm48, %v318, 0.0
    %v320 = vsel %vm49, %v317, 0.0
    %v321 = vstv %s76
    %v322 = vmul.f32 %v321, %v319
    %v323 = vmul.f32 %v321, %v320
    %v324 = vadd.f32 %v295, %v322
    %v325 = vadd.f32 %v296, %v323
    %v326 = vstv %s77
    %v327 = vmul.f32 %v326, %v319
    %v328 = vmul.f32 %v326, %v320
    %v329 = vadd.f32 %v300, %v327
    %v330 = vadd.f32 %v301, %v328
    %v331 = vstv %s78
    %v332 = vmul.f32 %v331, %v319
    %v333 = vmul.f32 %v331, %v320
    %v334 = vadd.f32 %v305, %v332
    %v335 = vadd.f32 %v306, %v333
    %v336 = vstv %s79
    %v337 = vmul.f32 %v336, %v319
    %v338 = vmul.f32 %v336, %v320
    %v339 = vadd.f32 %v310, %v337
    %v340 = vadd.f32 %v311, %v338
    %341 = vrot.lane.b32.xlu0 %v127, 1
    %v342 = vpop.permute.xlu0 %341
    %343 = vrot.lane.b32.xlu0 %v128, 1
    %v344 = vpop.permute.xlu0 %343
    %v345 = vsel %vm316, %v342, %v344
    %v346 = vsel %vm316, %v344, %v342
    %v347 = vsel %vm48, %v346, 0.0
    %v348 = vsel %vm49, %v345, 0.0
    %v349 = vstv %s80
    %v350 = vmul.f32 %v349, %v347
    %v351 = vmul.f32 %v349, %v348
    %v352 = vadd.f32 %v324, %v350
    %v353 = vadd.f32 %v325, %v351
    %v354 = vstv %s81
    %v355 = vmul.f32 %v354, %v347
    %v356 = vmul.f32 %v354, %v348
    %v357 = vadd.f32 %v329, %v355
    %v358 = vadd.f32 %v330, %v356
    %v359 = vstv %s82
    %v360 = vmul.f32 %v359, %v347
    %v361 = vmul.f32 %v359, %v348
    %v362 = vadd.f32 %v334, %v360
    %v363 = vadd.f32 %v335, %v361
    %v364 = vstv %s83
    %v365 = vmul.f32 %v364, %v347
    %v366 = vmul.f32 %v364, %v348
    %v367 = vadd.f32 %v339, %v365
    %v368 = vadd.f32 %v340, %v366
    %v369 = vstv %s84
    %v370 = vmul.f32 %v369, %v124
    %v371 = vmul.f32 %v369, %v125
    %v372 = vadd.f32 %v352, %v370
    %v373 = vadd.f32 %v353, %v371
    %v374 = vstv %s85
    %v375 = vmul.f32 %v374, %v124
    %v376 = vmul.f32 %v374, %v125
    %v377 = vadd.f32 %v357, %v375
    %v378 = vadd.f32 %v358, %v376
    %v379 = vstv %s86
    %v380 = vmul.f32 %v379, %v124
    %v381 = vmul.f32 %v379, %v125
    %v382 = vadd.f32 %v362, %v380
    %v383 = vadd.f32 %v363, %v381
    %v384 = vstv %s87
    %v385 = vmul.f32 %v384, %v124
    %v386 = vmul.f32 %v384, %v125
    %v387 = vadd.f32 %v367, %v385
    %v388 = vadd.f32 %v368, %v386
    %v389 = vstv %s88
    %v390 = vmul.f32 %v389, %v127
    %v391 = vmul.f32 %v389, %v128
    %v392 = vadd.f32 %v372, %v390
    %v393 = vadd.f32 %v373, %v391
    %v394 = vstv %s89
    %v395 = vmul.f32 %v394, %v127
    %v396 = vmul.f32 %v394, %v128
    %v397 = vadd.f32 %v377, %v395
    %v398 = vadd.f32 %v378, %v396
    %v399 = vstv %s90
    %v400 = vmul.f32 %v399, %v127
    %v401 = vmul.f32 %v399, %v128
    %v402 = vadd.f32 %v382, %v400
    %v403 = vadd.f32 %v383, %v401
    %v404 = vstv %s91
    %v405 = vmul.f32 %v404, %v127
    %v406 = vmul.f32 %v404, %v128
    %v407 = vadd.f32 %v387, %v405
    %v408 = vadd.f32 %v388, %v406
    %409 = vrot.lane.b32.xlu0 %v124, 127
    %v410 = vpop.permute.xlu0 %409
    %411 = vrot.lane.b32.xlu0 %v125, 127
    %v412 = vpop.permute.xlu0 %411
    %vm413 = vcmp.lt.s32.totalorder %v40, 127
    %v414 = vsel %vm413, %v410, %v412
    %v415 = vsel %vm413, %v412, %v410
    %v416 = vsel %vm50, %v414, 0.0
    %v417 = vsel %vm51, %v415, 0.0
    %v418 = vstv %s92
    %v419 = vmul.f32 %v418, %v416
    %v420 = vmul.f32 %v418, %v417
    %v421 = vadd.f32 %v392, %v419
    %v422 = vadd.f32 %v393, %v420
    %v423 = vstv %s93
    %v424 = vmul.f32 %v423, %v416
    %v425 = vmul.f32 %v423, %v417
    %v426 = vadd.f32 %v397, %v424
    %v427 = vadd.f32 %v398, %v425
    %v428 = vstv %s94
    %v429 = vmul.f32 %v428, %v416
    %v430 = vmul.f32 %v428, %v417
    %v431 = vadd.f32 %v402, %v429
    %v432 = vadd.f32 %v403, %v430
    %v433 = vstv %s95
    %v434 = vmul.f32 %v433, %v416
    %v435 = vmul.f32 %v433, %v417
    %v436 = vadd.f32 %v407, %v434
    %v437 = vadd.f32 %v408, %v435
    %438 = vrot.lane.b32.xlu0 %v127, 127
    %v439 = vpop.permute.xlu0 %438
    %440 = vrot.lane.b32.xlu0 %v128, 127
    %v441 = vpop.permute.xlu0 %440
    %v442 = vsel %vm413, %v439, %v441
    %v443 = vsel %vm413, %v441, %v439
    %v444 = vsel %vm50, %v442, 0.0
    %v445 = vsel %vm51, %v443, 0.0
    %v446 = vstv %s96
    %v447 = vmul.f32 %v446, %v444
    %v448 = vmul.f32 %v446, %v445
    %v449 = vadd.f32 %v421, %v447
    %v450 = vadd.f32 %v422, %v448
    %v451 = vstv %s97
    %v452 = vmul.f32 %v451, %v444
    %v453 = vmul.f32 %v451, %v445
    %v454 = vadd.f32 %v426, %v452
    %v455 = vadd.f32 %v427, %v453
    %v456 = vstv %s98
    %v457 = vmul.f32 %v456, %v444
    %v458 = vmul.f32 %v456, %v445
    %v459 = vadd.f32 %v431, %v457
    %v460 = vadd.f32 %v432, %v458
    %v461 = vstv %s99
    %v462 = vmul.f32 %v461, %v444
    %v463 = vmul.f32 %v461, %v445
    %v464 = vadd.f32 %v436, %v462
    %v465 = vadd.f32 %v437, %v463
    %vm466 = vmand %vm46, %vm48
    %vm467 = vmand %vm47, %vm49
    %468 = vrot.lane.b32.xlu0 %v124, 113
    %v469 = vpop.permute.xlu0 %468
    %470 = vrot.lane.b32.xlu0 %v125, 113
    %v471 = vpop.permute.xlu0 %470
    %vm472 = vcmp.lt.s32.totalorder %v40, 113
    %v473 = vsel %vm472, %v469, %v471
    %v474 = vsel %vm472, %v471, %v469
    %v475 = vsel %vm466, %v473, 0.0
    %v476 = vsel %vm467, %v474, 0.0
    %v477 = vstv %s100
    %v478 = vmul.f32 %v477, %v475
    %v479 = vmul.f32 %v477, %v476
    %v480 = vadd.f32 %v449, %v478
    %v481 = vadd.f32 %v450, %v479
    %v482 = vstv %s101
    %v483 = vmul.f32 %v482, %v475
    %v484 = vmul.f32 %v482, %v476
    %v485 = vadd.f32 %v454, %v483
    %v486 = vadd.f32 %v455, %v484
    %v487 = vstv %s102
    %v488 = vmul.f32 %v487, %v475
    %v489 = vmul.f32 %v487, %v476
    %v490 = vadd.f32 %v459, %v488
    %v491 = vadd.f32 %v460, %v489
    %v492 = vstv %s103
    %v493 = vmul.f32 %v492, %v475
    %v494 = vmul.f32 %v492, %v476
    %v495 = vadd.f32 %v464, %v493
    %v496 = vadd.f32 %v465, %v494
    %497 = vrot.lane.b32.xlu0 %v127, 113
    %v498 = vpop.permute.xlu0 %497
    %499 = vrot.lane.b32.xlu0 %v128, 113
    %v500 = vpop.permute.xlu0 %499
    %v501 = vsel %vm472, %v498, %v500
    %v502 = vsel %vm472, %v500, %v498
    %v503 = vsel %vm466, %v501, 0.0
    %v504 = vsel %vm467, %v502, 0.0
    %v505 = vstv %s104
    %v506 = vmul.f32 %v505, %v503
    %v507 = vmul.f32 %v505, %v504
    %v508 = vadd.f32 %v480, %v506
    %v509 = vadd.f32 %v481, %v507
    %v510 = vstv %s105
    %v511 = vmul.f32 %v510, %v503
    %v512 = vmul.f32 %v510, %v504
    %v513 = vadd.f32 %v485, %v511
    %v514 = vadd.f32 %v486, %v512
    %v515 = vstv %s106
    %v516 = vmul.f32 %v515, %v503
    %v517 = vmul.f32 %v515, %v504
    %v518 = vadd.f32 %v490, %v516
    %v519 = vadd.f32 %v491, %v517
    %v520 = vstv %s107
    %v521 = vmul.f32 %v520, %v503
    %v522 = vmul.f32 %v520, %v504
    %v523 = vadd.f32 %v495, %v521
    %v524 = vadd.f32 %v496, %v522
    %525 = vrot.lane.b32.xlu0 %v124, 112
    %v526 = vpop.permute.xlu0 %525
    %527 = vrot.lane.b32.xlu0 %v125, 112
    %v528 = vpop.permute.xlu0 %527
    %vm529 = vcmp.lt.s32.totalorder %v40, 112
    %v530 = vsel %vm529, %v526, %v528
    %v531 = vsel %vm529, %v528, %v526
    %v532 = vsel %vm46, %v530, 0.0
    %v533 = vsel %vm47, %v531, 0.0
    %v534 = vstv %s108
    %v535 = vmul.f32 %v534, %v532
    %v536 = vmul.f32 %v534, %v533
    %v537 = vadd.f32 %v508, %v535
    %v538 = vadd.f32 %v509, %v536
    %v539 = vstv %s109
    %v540 = vmul.f32 %v539, %v532
    %v541 = vmul.f32 %v539, %v533
    %v542 = vadd.f32 %v513, %v540
    %v543 = vadd.f32 %v514, %v541
    %v544 = vstv %s110
    %v545 = vmul.f32 %v544, %v532
    %v546 = vmul.f32 %v544, %v533
    %v547 = vadd.f32 %v518, %v545
    %v548 = vadd.f32 %v519, %v546
    %v549 = vstv %s111
    %v550 = vmul.f32 %v549, %v532
    %v551 = vmul.f32 %v549, %v533
    %v552 = vadd.f32 %v523, %v550
    %v553 = vadd.f32 %v524, %v551
    %554 = vrot.lane.b32.xlu0 %v127, 112
    %v555 = vpop.permute.xlu0 %554
    %556 = vrot.lane.b32.xlu0 %v128, 112
    %v557 = vpop.permute.xlu0 %556
    %v558 = vsel %vm529, %v555, %v557
    %v559 = vsel %vm529, %v557, %v555
    %v560 = vsel %vm46, %v558, 0.0
    %v561 = vsel %vm47, %v559, 0.0
    %v562 = vstv %s112
    %v563 = vmul.f32 %v562, %v560
    %v564 = vmul.f32 %v562, %v561
    %v565 = vadd.f32 %v537, %v563
    %v566 = vadd.f32 %v538, %v564
    %v567 = vstv %s113
    %v568 = vmul.f32 %v567, %v560
    %v569 = vmul.f32 %v567, %v561
    %v570 = vadd.f32 %v542, %v568
    %v571 = vadd.f32 %v543, %v569
    %v572 = vstv %s114
    %v573 = vmul.f32 %v572, %v560
    %v574 = vmul.f32 %v572, %v561
    %v575 = vadd.f32 %v547, %v573
    %v576 = vadd.f32 %v548, %v574
    %v577 = vstv %s115
    %v578 = vmul.f32 %v577, %v560
    %v579 = vmul.f32 %v577, %v561
    %v580 = vadd.f32 %v552, %v578
    %v581 = vadd.f32 %v553, %v579
    %vm582 = vmand %vm46, %vm50
    %vm583 = vmand %vm47, %vm51
    %584 = vrot.lane.b32.xlu0 %v124, 111
    %v585 = vpop.permute.xlu0 %584
    %586 = vrot.lane.b32.xlu0 %v125, 111
    %v587 = vpop.permute.xlu0 %586
    %vm588 = vcmp.lt.s32.totalorder %v40, 111
    %v589 = vsel %vm588, %v585, %v587
    %v590 = vsel %vm588, %v587, %v585
    %v591 = vsel %vm582, %v589, 0.0
    %v592 = vsel %vm583, %v590, 0.0
    %v593 = vstv %s116
    %v594 = vmul.f32 %v593, %v591
    %v595 = vmul.f32 %v593, %v592
    %v596 = vadd.f32 %v565, %v594
    %v597 = vadd.f32 %v566, %v595
    %v598 = vstv %s117
    %v599 = vmul.f32 %v598, %v591
    %v600 = vmul.f32 %v598, %v592
    %v601 = vadd.f32 %v570, %v599
    %v602 = vadd.f32 %v571, %v600
    %v603 = vstv %s118
    %v604 = vmul.f32 %v603, %v591
    %v605 = vmul.f32 %v603, %v592
    %v606 = vadd.f32 %v575, %v604
    %v607 = vadd.f32 %v576, %v605
    %v608 = vstv %s119
    %v609 = vmul.f32 %v608, %v591
    %v610 = vmul.f32 %v608, %v592
    %v611 = vadd.f32 %v580, %v609
    %v612 = vadd.f32 %v581, %v610
    %613 = vrot.lane.b32.xlu0 %v127, 111
    %v614 = vpop.permute.xlu0 %613
    %615 = vrot.lane.b32.xlu0 %v128, 111
    %v616 = vpop.permute.xlu0 %615
    %v617 = vsel %vm588, %v614, %v616
    %v618 = vsel %vm588, %v616, %v614
    %v619 = vsel %vm582, %v617, 0.0
    %v620 = vsel %vm583, %v618, 0.0
    %v621 = vstv %s120
    %v622 = vmul.f32 %v621, %v619
    %v623 = vmul.f32 %v621, %v620
    %v624 = vadd.f32 %v596, %v622
    %v625 = vadd.f32 %v597, %v623
    %v626 = vstv %s121
    %v627 = vmul.f32 %v626, %v619
    %v628 = vmul.f32 %v626, %v620
    %v629 = vadd.f32 %v601, %v627
    %v630 = vadd.f32 %v602, %v628
    %v631 = vstv %s122
    %v632 = vmul.f32 %v631, %v619
    %v633 = vmul.f32 %v631, %v620
    %v634 = vadd.f32 %v606, %v632
    %v635 = vadd.f32 %v607, %v633
    %v636 = vstv %s123
    %v637 = vmul.f32 %v636, %v619
    %v638 = vmul.f32 %v636, %v620
    %v639 = vadd.f32 %v611, %v637
    %v640 = vadd.f32 %v612, %v638
    %641 = vst [vmem:[%s3] sm:$0xff] %v624
    %642 = vst [vmem:[%s3 + $0x8] sm:$0xff] %v625
    %s643 = scalar_lea.vmem %s3, 16
    %644 = vst [vmem:[%s643] sm:$0xff] %v629
    %645 = vst [vmem:[%s643 + $0x8] sm:$0xff] %v630
    %s646 = scalar_lea.vmem %s3, 32
    %647 = vst [vmem:[%s646] sm:$0xff] %v634
    %648 = vst [vmem:[%s646 + $0x8] sm:$0xff] %v635
    %s649 = scalar_lea.vmem %s3, 48
    %650 = vst [vmem:[%s649] sm:$0xff] %v639
    %651 = vst [vmem:[%s649 + $0x8] sm:$0xff] %v640
    // Predicated region
    $region22: #{multi_coil_forward.1} parent=1 // pred_check
      _
    $region23: #{multi_coil_forward.1} parent=1 // pred_check_branch
      %653 = sbr.rel (0) target = $region25
    $region24: #{multi_coil_forward.1} parent=1 // pred_region
      _
    $region25: #{multi_coil_forward.1} parent=1 // pred_fallthru
      _
    // Predicated region
    $region26: #{multi_coil_forward.1} parent=1 // pred_check
      _
    $region27: #{multi_coil_forward.1} parent=1 // pred_check_branch
      %655 = sbr.rel (0) target = $region29
    $region28: #{multi_coil_forward.1} parent=1 // pred_region
      _
    $region29: #{multi_coil_forward.1} parent=1 // pred_fallthru
      _
    %656 = vsyncpa [#allocation3], 1
    %657 = vsyncpa [#allocation5], 1

</llo_original>
